<compile_context>
chip_gen: v7x
topology: tpu7x:2x2x1
jax: 0.10.0
libtpu: 0.0.40
codegen_flags: <defaults>
</compile_context>

<pallas_src>
import functools
import math

import jax
import jax.numpy as jnp
from jax.experimental import pallas as pl
from jax.experimental.pallas import tpu as pltpu

LN_EPS = 1e-5


def _round_up(a, b):
    return (a + b - 1) // b * b


def _fused_kernel(x_ref, w_ref, b_ref, g_ref, beta_ref, mask_ref, o_ref,
                  *, use_ln, apply_dropout):
    # ---- Linear: x @ W^T + b  (W already transposed to (K, N), bf16 -> f32 acc) ----
    y = jnp.dot(x_ref[...], w_ref[...], preferred_element_type=jnp.float32)
    y = y + b_ref[...]                       # (1, N) broadcasts over rows

    # ---- ReLU ----
    y = jnp.maximum(y, 0.0)

    # ---- LayerNorm over last dim (elementwise affine), f32 math ----
    if use_ln:
        mean = jnp.mean(y, axis=-1, keepdims=True)
        cent = y - mean
        var = jnp.mean(cent * cent, axis=-1, keepdims=True)
        y = cent * jax.lax.rsqrt(var + LN_EPS)
        y = y * g_ref[...] + beta_ref[...]

    # ---- Dropout: precomputed inverted-dropout scale mask {0, 1/(1-p)} ----
    if apply_dropout:
        y = y * mask_ref[...].astype(jnp.float32)

    o_ref[...] = y.astype(o_ref.dtype)


def norm_l_res_d_forward(x, w, b, gamma, beta, *, drop_p=0.2, use_ln=True,
                         training=True, rng_key=None, tm=1024):
    """x: (..., K) float.  w: (N, K) torch-style Linear weight.  b, gamma, beta: (N,)."""
    orig_shape = x.shape
    K = orig_shape[-1]
    N = w.shape[0]
    M = math.prod(orig_shape[:-1]) if len(orig_shape) > 1 else 1

    x2d = jnp.asarray(x).reshape(M, K).astype(jnp.bfloat16)
    w_t = jnp.asarray(w, jnp.bfloat16).T                    # (K, N)
    b2d = jnp.asarray(b, jnp.float32).reshape(1, N)
    g2d = jnp.asarray(gamma, jnp.float32).reshape(1, N)
    beta2d = jnp.asarray(beta, jnp.float32).reshape(1, N)

    apply_dropout = bool(training) and float(drop_p) > 0.0
    if apply_dropout:
        if rng_key is None:
            rng_key = jax.random.PRNGKey(0)
        keep = jax.random.bernoulli(rng_key, 1.0 - float(drop_p), (M, N))
        mask = (keep.astype(jnp.float32)
                * (1.0 / (1.0 - float(drop_p)))).astype(jnp.bfloat16)
        mask_spec = pl.BlockSpec((None, N), lambda i: (i, 0))
    else:
        mask = jnp.ones((1, N), jnp.bfloat16)               # dummy, unused in kernel
        mask_spec = pl.BlockSpec((1, N), lambda i: (0, 0))

    # Row-tile size: big enough to amortize per-step overhead, 16-aligned for bf16
    # sublane packing, capped so VMEM (incl. 64 MiB v7x) is never a concern.
    TM = min(int(tm), _round_up(M, 16))
    grid = (pl.cdiv(M, TM),)

    if apply_dropout:
        mask_spec = pl.BlockSpec((TM, N), lambda i: (i, 0))

    kernel = functools.partial(_fused_kernel, use_ln=bool(use_ln),
                               apply_dropout=apply_dropout)

    out = pl.pallas_call(
        kernel,
        out_shape=jax.ShapeDtypeStruct((M, N), jnp.float32),
        grid=grid,
        in_specs=[
            pl.BlockSpec((TM, K), lambda i: (i, 0)),   # x row tile (streamed)
            pl.BlockSpec((K, N), lambda i: (0, 0)),    # W^T (VMEM-resident)
            pl.BlockSpec((1, N), lambda i: (0, 0)),    # bias
            pl.BlockSpec((1, N), lambda i: (0, 0)),    # LN gamma
            pl.BlockSpec((1, N), lambda i: (0, 0)),    # LN beta
            mask_spec,                                 # dropout scale mask
        ],
        out_specs=pl.BlockSpec((TM, N), lambda i: (i, 0)),
        compiler_params=pltpu.CompilerParams(
            dimension_semantics=("parallel",),
            vmem_limit_bytes=64 * 1024 * 1024),
    )(x2d, w_t, b2d, g2d, beta2d, mask)

    return out.reshape(orig_shape[:-1] + (N,))


if __name__ == "__main__":
    # Module config: input_dim == output_dim == 32, ln_high=True, drop=0.2
    input_dim = 32
    output_dim = 32
    batch, seq = 2, 8
    drop_p = 0.2

    key = jax.random.PRNGKey(0)
    kx, kw, kb, kdrop = jax.random.split(key, 4)

    x = jax.random.normal(kx, (batch, seq, input_dim), dtype=jnp.float32)

    # Deterministic parameter init (PyTorch Linear-style uniform bounds).
    bound = 1.0 / math.sqrt(input_dim)
    w = jax.random.uniform(kw, (output_dim, input_dim), jnp.float32, -bound, bound)
    b = jax.random.uniform(kb, (output_dim,), jnp.float32, -bound, bound)
    gamma = jnp.ones((output_dim,), jnp.float32)   # LayerNorm weight
    beta = jnp.zeros((output_dim,), jnp.float32)   # LayerNorm bias

    out = norm_l_res_d_forward(x, w, b, gamma, beta, drop_p=drop_p, use_ln=True,
                               training=True, rng_key=kdrop)
    out = jax.block_until_ready(out)
    assert out.shape == (batch, seq, output_dim)

    # Pure-JAX reference with identical bf16 input rounding and identical dropout key.
    M = batch * seq
    xb = x.reshape(M, input_dim).astype(jnp.bfloat16)
    wb = w.astype(jnp.bfloat16).T
    y = jnp.dot(xb, wb, preferred_element_type=jnp.float32) + b
    y = jnp.maximum(y, 0.0)
    mu = jnp.mean(y, axis=-1, keepdims=True)
    var = jnp.mean((y - mu) ** 2, axis=-1, keepdims=True)
    y = (y - mu) * jax.lax.rsqrt(var + LN_EPS) * gamma + beta
    keep = jax.random.bernoulli(kdrop, 1.0 - drop_p, (M, output_dim))
    mask = (keep.astype(jnp.float32) * (1.0 / (1.0 - drop_p))).astype(jnp.bfloat16)
    y_ref = (y * mask.astype(jnp.float32)).reshape(batch, seq, output_dim)

    assert jnp.allclose(out, y_ref, atol=1e-2, rtol=1e-2), "mismatch vs reference"

    # Eval-mode path (dropout disabled) also runs.
    out_eval = norm_l_res_d_forward(x, w, b, gamma, beta, drop_p=drop_p,
                                    use_ln=True, training=False)
    jax.block_until_ready(out_eval)

    print("KERNEL_OK")
</pallas_src>

<mosaic_0001>
module attributes {stable_mosaic.version = 11 : i64} {
  func.func @_fused_kernel(%arg0: i32, %arg1: memref<16x32xbf16, #tpu.memory_space<vmem>>, %arg2: memref<32x32xbf16, #tpu.memory_space<vmem>>, %arg3: memref<1x32xf32, #tpu.memory_space<vmem>>, %arg4: memref<1x32xf32, #tpu.memory_space<vmem>>, %arg5: memref<1x32xf32, #tpu.memory_space<vmem>>, %arg6: memref<16x32xbf16, #tpu.memory_space<vmem>>, %arg7: memref<16x32xf32, #tpu.memory_space<vmem>>) attributes {dimension_semantics = [#tpu.dimension_semantics<parallel>], iteration_bounds = array<i64: 1>, scalar_prefetch = 0 : i64, scratch_operands = 0 : i64, tpu.core_type = #tpu.core_type<tc>, window_params = [{transform_indices = @transform_0, window_bounds = array<i64: 16, 32>}, {pipeline_mode = #tpu.pipeline_mode<synchronous>, transform_indices = @transform_1, window_bounds = array<i64: 32, 32>}, {pipeline_mode = #tpu.pipeline_mode<synchronous>, transform_indices = @transform_2, window_bounds = array<i64: 1, 32>}, {pipeline_mode = #tpu.pipeline_mode<synchronous>, transform_indices = @transform_3, window_bounds = array<i64: 1, 32>}, {pipeline_mode = #tpu.pipeline_mode<synchronous>, transform_indices = @transform_4, window_bounds = array<i64: 1, 32>}, {transform_indices = @transform_5, window_bounds = array<i64: 16, 32>}, {transform_indices = @transform_6, window_bounds = array<i64: 16, 32>}]} {
    %c0 = arith.constant 0 : index
    %c0_0 = arith.constant 0 : index
    %0 = vector.load %arg1[%c0, %c0_0] : memref<16x32xbf16, #tpu.memory_space<vmem>>, vector<16x32xbf16>
    %c0_1 = arith.constant 0 : index
    %c0_2 = arith.constant 0 : index
    %1 = vector.load %arg2[%c0_1, %c0_2] : memref<32x32xbf16, #tpu.memory_space<vmem>>, vector<32x32xbf16>
    %cst = arith.constant dense<0.000000e+00> : vector<16x32xf32>
    %2 = tpu.matmul %0, %1, %cst {dimension_numbers = #tpu.dot_dimension_numbers<[1], [0], [0], [1], [0, 0, 1, 1], [], []>} : vector<16x32xbf16>, vector<32x32xbf16>, vector<16x32xf32> -> vector<16x32xf32>
    %c0_3 = arith.constant 0 : index
    %c0_4 = arith.constant 0 : index
    %3 = vector.load %arg3[%c0_3, %c0_4] : memref<1x32xf32, #tpu.memory_space<vmem>>, vector<1x32xf32>
    %4 = vector.broadcast %3 : vector<1x32xf32> to vector<16x32xf32>
    %5 = arith.addf %2, %4 : vector<16x32xf32>
    %cst_5 = arith.constant 0.000000e+00 : f32
    %6 = vector.broadcast %cst_5 : f32 to vector<16x32xf32>
    %7 = arith.maximumf %5, %6 : vector<16x32xf32>
    %cst_6 = arith.constant dense<0.000000e+00> : vector<16xf32>
    %8 = vector.multi_reduction <add>, %7, %cst_6 [1] : vector<16x32xf32> to vector<16xf32>
    %9 = vector.shape_cast %8 : vector<16xf32> to vector<16x1xf32>
    %cst_7 = arith.constant 3.200000e+01 : f32
    %10 = vector.broadcast %cst_7 : f32 to vector<16x1xf32>
    %11 = arith.divf %9, %10 : vector<16x1xf32>
    %12 = vector.broadcast %11 : vector<16x1xf32> to vector<16x32xf32>
    %13 = arith.subf %7, %12 : vector<16x32xf32>
    %14 = arith.mulf %13, %13 : vector<16x32xf32>
    %cst_8 = arith.constant dense<0.000000e+00> : vector<16xf32>
    %15 = vector.multi_reduction <add>, %14, %cst_8 [1] : vector<16x32xf32> to vector<16xf32>
    %16 = vector.shape_cast %15 : vector<16xf32> to vector<16x1xf32>
    %cst_9 = arith.constant 3.200000e+01 : f32
    %17 = vector.broadcast %cst_9 : f32 to vector<16x1xf32>
    %18 = arith.divf %16, %17 : vector<16x1xf32>
    %cst_10 = arith.constant 9.99999974E-6 : f32
    %19 = vector.broadcast %cst_10 : f32 to vector<16x1xf32>
    %20 = arith.addf %18, %19 : vector<16x1xf32>
    %21 = math.rsqrt %20 : vector<16x1xf32>
    %22 = vector.broadcast %21 : vector<16x1xf32> to vector<16x32xf32>
    %23 = arith.mulf %13, %22 : vector<16x32xf32>
    %c0_11 = arith.constant 0 : index
    %c0_12 = arith.constant 0 : index
    %24 = vector.load %arg4[%c0_11, %c0_12] : memref<1x32xf32, #tpu.memory_space<vmem>>, vector<1x32xf32>
    %25 = vector.broadcast %24 : vector<1x32xf32> to vector<16x32xf32>
    %26 = arith.mulf %23, %25 : vector<16x32xf32>
    %c0_13 = arith.constant 0 : index
    %c0_14 = arith.constant 0 : index
    %27 = vector.load %arg5[%c0_13, %c0_14] : memref<1x32xf32, #tpu.memory_space<vmem>>, vector<1x32xf32>
    %28 = vector.broadcast %27 : vector<1x32xf32> to vector<16x32xf32>
    %29 = arith.addf %26, %28 : vector<16x32xf32>
    %c0_15 = arith.constant 0 : index
    %c0_16 = arith.constant 0 : index
    %30 = vector.load %arg6[%c0_15, %c0_16] : memref<16x32xbf16, #tpu.memory_space<vmem>>, vector<16x32xbf16>
    %31 = arith.extf %30 : vector<16x32xbf16> to vector<16x32xf32>
    %32 = arith.mulf %29, %31 : vector<16x32xf32>
    %c0_17 = arith.constant 0 : index
    %c0_18 = arith.constant 0 : index
    %33 = vector.load %arg7[%c0_17, %c0_18] : memref<16x32xf32, #tpu.memory_space<vmem>>, vector<16x32xf32>
    tpu.vector_store %arg7[%c0_17, %c0_18], %32 {strides = array<i32>} : memref<16x32xf32, #tpu.memory_space<vmem>>, vector<16x32xf32>,
    return
  }
  func.func @transform_0(%arg0: i32) -> (i32, i32) {
    %c0_i32 = arith.constant 0 : i32
    %c0_i32_0 = arith.constant 0 : i32
    return %arg0, %c0_i32 : i32, i32
  }
  func.func @transform_1(%arg0: i32) -> (i32, i32) {
    %c0_i32 = arith.constant 0 : i32
    %c0_i32_0 = arith.constant 0 : i32
    %c0_i32_1 = arith.constant 0 : i32
    return %c0_i32, %c0_i32_0 : i32, i32
  }
  func.func @transform_2(%arg0: i32) -> (i32, i32) {
    %c0_i32 = arith.constant 0 : i32
    %c0_i32_0 = arith.constant 0 : i32
    %c0_i32_1 = arith.constant 0 : i32
    return %c0_i32, %c0_i32_0 : i32, i32
  }
  func.func @transform_3(%arg0: i32) -> (i32, i32) {
    %c0_i32 = arith.constant 0 : i32
    %c0_i32_0 = arith.constant 0 : i32
    %c0_i32_1 = arith.constant 0 : i32
    return %c0_i32, %c0_i32_0 : i32, i32
  }
  func.func @transform_4(%arg0: i32) -> (i32, i32) {
    %c0_i32 = arith.constant 0 : i32
    %c0_i32_0 = arith.constant 0 : i32
    %c0_i32_1 = arith.constant 0 : i32
    return %c0_i32, %c0_i32_0 : i32, i32
  }
  func.func @transform_5(%arg0: i32) -> (i32, i32) {
    %c0_i32 = arith.constant 0 : i32
    %c0_i32_0 = arith.constant 0 : i32
    return %arg0, %c0_i32 : i32, i32
  }
  func.func @transform_6(%arg0: i32) -> (i32, i32) {
    %c0_i32 = arith.constant 0 : i32
    %c0_i32_0 = arith.constant 0 : i32
    return %arg0, %c0_i32 : i32, i32
  }
}

</mosaic_0001>

<llo_original>
// kernel: tpu_custom_call.1
$region0: #{tpu_custom_call.1}
  #allocation0 [shape = 'u32[]', space=smem, size = 0x4, offset = 0x4, fixed_abs, tag = 'smem constant byte address 0x4 - core index']
  #allocation1 [shape = 'u32[144,128]{1,0:T(1,128)}', space=vmem, size = 0x12000, scoped, tag = 'internal scratch']
  %s0 = inlined_call_operand.hbm [shape: bf16[16,32], index: 0, kind: input, shape index: {}]
  %s1 = inlined_call_operand.hbm [shape: bf16[32,32], index: 1, kind: input, shape index: {}]
  %s2 = inlined_call_operand.hbm [shape: f32[1,32], index: 2, kind: input, shape index: {}]
  %s3 = inlined_call_operand.hbm [shape: f32[1,32], index: 3, kind: input, shape index: {}]
  %s4 = inlined_call_operand.hbm [shape: f32[1,32], index: 4, kind: input, shape index: {}]
  %s5 = inlined_call_operand.hbm [shape: bf16[16,32], index: 5, kind: input, shape index: {}]
  %s6 = inlined_call_operand.hbm [shape: f32[16,32], index: 6, kind: output, shape index: {}]
  %s7 = sld [smem:[#allocation0]]
  $region58: #{tpu_custom_call.1} parent=0
    _
  %s9 = ssub.s32 1, %s7
  %s10 = scalar_select 0, %s9, %s7
  $region1: #{tpu_custom_call.1} parent=0
    #allocation2 [shape = 'u8[4096]{0}', space=vmem, size = 0x1000, scoped, tag = 'input window, operand 0, single buffered']
    #allocation3 [shape = 's32[1]{0}', space=sflag, size = 0x4, scoped, tag = 'scoped memory for tpu_custom_call.1']
    #allocation4 [shape = 's32[1]{0}', space=sflag, size = 0x4, scoped, tag = 'scoped memory for tpu_custom_call.1']
    #allocation5 [shape = 'u8[8192]{0}', space=vmem, size = 0x2000, scoped, tag = 'input window, operand 1, single buffered']
    #allocation6 [shape = 's32[1]{0}', space=sflag, size = 0x4, scoped, tag = 'scoped memory for tpu_custom_call.1']
    #allocation7 [shape = 'u8[512]{0}', space=vmem, size = 0x400, scoped, tag = 'input window, operand 2, single buffered']
    #allocation8 [shape = 'u8[512]{0}', space=vmem, size = 0x400, scoped, tag = 'input window, operand 3, single buffered']
    #allocation9 [shape = 's32[1]{0}', space=sflag, size = 0x4, scoped, tag = 'scoped memory for tpu_custom_call.1']
    #allocation10 [shape = 'u8[512]{0}', space=vmem, size = 0x400, scoped, tag = 'input window, operand 4, single buffered']
    #allocation11 [shape = 'u8[4096]{0}', space=vmem, size = 0x1000, scoped, tag = 'input window, operand 5, single buffered']
    #allocation12 [shape = 's32[1]{0}', space=sflag, size = 0x4, scoped, tag = 'scoped memory for tpu_custom_call.1']
    #allocation13 [shape = 'u8[8192]{0}', space=vmem, size = 0x2000, scoped, tag = 'output window, operand 0, single buffered']
    %11 = vsyncpa [#allocation3], 0
    %12 = vsyncpa [#allocation6], 0
    %13 = vsyncpa [#allocation9], 0
    %14 = vsyncpa [#allocation12], 0
    %15 = vsyncpa [#allocation4], 0
    // Predicated region
    $region2: #{tpu_custom_call.1} parent=1 // pred_check
      _
    $region3: #{tpu_custom_call.1} parent=1 // pred_check_branch
      %17 = sbr.rel (0) target = $region5
    $region4: #{tpu_custom_call.1} parent=1 // pred_region
      %s19 = ssub.s32 128, 128
      %20 = vsyncadd [#allocation3], %s19
      %s21 = sshll.u32 [#allocation2], 4
      %s22 = int_to_ptr.vmem [resolvable:$true] %s21
      %27 = dma.hbm_to_vmem [thread:$0]  %s0, 128, %s22, [#allocation3], 64, 64, 4
    $region5: #{tpu_custom_call.1} parent=1 // pred_fallthru
      _
    // Predicated region
    $region6: #{tpu_custom_call.1} parent=1 // pred_check
      _
    $region7: #{tpu_custom_call.1} parent=1 // pred_check_branch
      %29 = sbr.rel (0) target = $region9
    $region8: #{tpu_custom_call.1} parent=1 // pred_region
      %s31 = ssub.s32 256, 256
      %32 = vsyncadd [#allocation6], %s31
      %s33 = sshll.u32 [#allocation5], 4
      %s34 = int_to_ptr.vmem [resolvable:$true] %s33
      %39 = dma.hbm_to_vmem [thread:$0]  %s1, 256, %s34, [#allocation6], 64, 64, 4
    $region9: #{tpu_custom_call.1} parent=1 // pred_fallthru
      _
    // Predicated region
    $region10: #{tpu_custom_call.1} parent=1 // pred_check
      _
    $region11: #{tpu_custom_call.1} parent=1 // pred_check_branch
      %41 = sbr.rel (0) target = $region13
    $region12: #{tpu_custom_call.1} parent=1 // pred_region
      %s43 = ssub.s32 16, 16
      %44 = vsyncadd [#allocation6], %s43
      %s46 = sshll.u32 [#allocation7], 4
      %s47 = int_to_ptr.vmem [resolvable:$true] %s46
      %49 = dma.hbm_to_vmem [thread:$0]  %s2, 16, %s47, [#allocation6]
    $region13: #{tpu_custom_call.1} parent=1 // pred_fallthru
      _
    // Predicated region
    $region14: #{tpu_custom_call.1} parent=1 // pred_check
      _
    $region15: #{tpu_custom_call.1} parent=1 // pred_check_branch
      %51 = sbr.rel (0) target = $region17
    $region16: #{tpu_custom_call.1} parent=1 // pred_region
      %s53 = ssub.s32 16, 16
      %54 = vsyncadd [#allocation9], %s53
      %s56 = sshll.u32 [#allocation8], 4
      %s57 = int_to_ptr.vmem [resolvable:$true] %s56
      %59 = dma.hbm_to_vmem [thread:$0]  %s3, 16, %s57, [#allocation9]
    $region17: #{tpu_custom_call.1} parent=1 // pred_fallthru
      _
    // Predicated region
    $region18: #{tpu_custom_call.1} parent=1 // pred_check
      _
    $region19: #{tpu_custom_call.1} parent=1 // pred_check_branch
      %61 = sbr.rel (0) target = $region21
    $region20: #{tpu_custom_call.1} parent=1 // pred_region
      %s63 = ssub.s32 16, 16
      %64 = vsyncadd [#allocation9], %s63
      %s66 = sshll.u32 [#allocation10], 4
      %s67 = int_to_ptr.vmem [resolvable:$true] %s66
      %69 = dma.hbm_to_vmem [thread:$0]  %s4, 16, %s67, [#allocation9]
    $region21: #{tpu_custom_call.1} parent=1 // pred_fallthru
      _
    // Predicated region
    $region22: #{tpu_custom_call.1} parent=1 // pred_check
      _
    $region23: #{tpu_custom_call.1} parent=1 // pred_check_branch
      %71 = sbr.rel (0) target = $region25
    $region24: #{tpu_custom_call.1} parent=1 // pred_region
      %s73 = ssub.s32 128, 128
      %74 = vsyncadd [#allocation12], %s73
      %s75 = sshll.u32 [#allocation11], 4
      %s76 = int_to_ptr.vmem [resolvable:$true] %s75
      %81 = dma.hbm_to_vmem [thread:$0]  %s5, 128, %s76, [#allocation12], 64, 64, 4
    $region25: #{tpu_custom_call.1} parent=1 // pred_fallthru
      _
    // Predicated region
    $region26: #{tpu_custom_call.1} parent=1 // pred_check
      _
    $region27: #{tpu_custom_call.1} parent=1 // pred_check_branch
      %83 = sbr.rel (0) target = $region29
    $region28: #{tpu_custom_call.1} parent=1 // pred_region
      %84 = dma.done [#allocation3], 128
    $region29: #{tpu_custom_call.1} parent=1 // pred_fallthru
      _
    // Predicated region
    $region30: #{tpu_custom_call.1} parent=1 // pred_check
      _
    $region31: #{tpu_custom_call.1} parent=1 // pred_check_branch
      %86 = sbr.rel (0) target = $region33
    $region32: #{tpu_custom_call.1} parent=1 // pred_region
      %87 = dma.done [#allocation6], 256
    $region33: #{tpu_custom_call.1} parent=1 // pred_fallthru
      _
    // Predicated region
    $region34: #{tpu_custom_call.1} parent=1 // pred_check
      _
    $region35: #{tpu_custom_call.1} parent=1 // pred_check_branch
      %89 = sbr.rel (0) target = $region37
    $region36: #{tpu_custom_call.1} parent=1 // pred_region
      %90 = dma.done [#allocation6], 16
    $region37: #{tpu_custom_call.1} parent=1 // pred_fallthru
      _
    // Predicated region
    $region38: #{tpu_custom_call.1} parent=1 // pred_check
      _
    $region39: #{tpu_custom_call.1} parent=1 // pred_check_branch
      %92 = sbr.rel (0) target = $region41
    $region40: #{tpu_custom_call.1} parent=1 // pred_region
      %93 = dma.done [#allocation9], 16
    $region41: #{tpu_custom_call.1} parent=1 // pred_fallthru
      _
    // Predicated region
    $region42: #{tpu_custom_call.1} parent=1 // pred_check
      _
    $region43: #{tpu_custom_call.1} parent=1 // pred_check_branch
      %95 = sbr.rel (0) target = $region45
    $region44: #{tpu_custom_call.1} parent=1 // pred_region
      %96 = dma.done [#allocation9], 16
    $region45: #{tpu_custom_call.1} parent=1 // pred_fallthru
      _
    // Predicated region
    $region46: #{tpu_custom_call.1} parent=1 // pred_check
      _
    $region47: #{tpu_custom_call.1} parent=1 // pred_check_branch
      %98 = sbr.rel (0) target = $region49
    $region48: #{tpu_custom_call.1} parent=1 // pred_region
      %99 = dma.done [#allocation12], 128
    $region49: #{tpu_custom_call.1} parent=1 // pred_fallthru
      _
    %v101 = vld [vmem:[#allocation2] sm:$0xf]
    %v102 = vld [vmem:[#allocation2 + $0x4] sm:$0xf]
    %v103 = vld [vmem:[#allocation5] sm:$0xf]
    %v104 = vld [vmem:[#allocation5 + $0x4] sm:$0xf]
    %v105 = vld [vmem:[#allocation5 + $0x8] sm:$0xf]
    %v106 = vld [vmem:[#allocation5 + $0xc] sm:$0xf]
    %v107 = vld [vmem:[#allocation7] sm:$0x1]
    %v109 = vlaneseq
    %v110 = vshrl.u32 %v109, 7
    %v111 = vsub.s32 0, %v110
    %v112 = vrot.slane %v107, %v111
    %v116 = vunpack.c.l.b16 %v101
    %v117 = vunpack.c.l.b16 %v102
    %v118 = vpack.c.b16 %v117, %v116
    %v123 = vunpack.c.l.b16 %v103
    %v124 = vunpack.c.l.b16 %v104
    %v125 = vunpack.c.l.b16 %v105
    %v126 = vunpack.c.l.b16 %v106
    %v127 = vpack.c.b16 %v124, %v123
    %v128 = vpack.c.b16 %v126, %v125
    %vm131 = vcmask 261120
    %v133 = vsel %vm131, %v118, 0
    %135 = vmatprep.subr.bf16.mxu0 0
    %136 = vmatpush1.bf16.msra.mxu0 %v127
    %137 = vmatprep.subr.bf16.mxu0 0
    %138 = vmatpush1.bf16.msra.mxu0 %v128
    %139 = vmatprep.subr.bf16.mxu0 0
    %140 = vmatpush1.bf16.msra.mxu0 0
    %141 = vmatprep.subr.bf16.mxu0 0
    %142 = vmatpush1.bf16.msra.mxu0 0
    %143 = vmatprep.subr.bf16.mxu0 0
    %144 = vmatpush1.bf16.msra.mxu0 0
    %145 = vmatprep.subr.bf16.mxu0 0
    %146 = vmatpush1.bf16.msra.mxu0 0
    %147 = vmatprep.subr.bf16.mxu0 0
    %148 = vmatpush1.bf16.msra.mxu0 0
    %149 = vmatprep.subr.bf16.mxu0 0
    %150 = vmatpush1.bf16.msra.mxu0 0
    %151 = vmatprep.subr.bf16.mxu0 0
    %152 = vmatpush1.bf16.msra.mxu0 0
    %153 = vmatprep.subr.bf16.mxu0 0
    %154 = vmatpush1.bf16.msra.mxu0 0
    %155 = vmatprep.subr.bf16.mxu0 0
    %156 = vmatpush1.bf16.msra.mxu0 0
    %157 = vmatprep.subr.bf16.mxu0 0
    %158 = vmatpush1.bf16.msra.mxu0 0
    %159 = vmatprep.subr.bf16.mxu0 0
    %160 = vmatpush1.bf16.msra.mxu0 0
    %161 = vmatprep.subr.bf16.mxu0 0
    %162 = vmatpush1.bf16.msra.mxu0 0
    %163 = vmatprep.subr.bf16.mxu0 0
    %164 = vmatpush1.bf16.msra.mxu0 0
    %165 = vmatprep.subr.bf16.mxu0 0
    %166 = vmatpush1.bf16.msra.mxu0 0
    %167 = vmatprep.mubr.bf16.mxu0 0
    %168 = vmatmul.mubr.bf16.gmra.mrb[0].mxu0 %v133
    %v169 = vpop.f32.mrb[0].mxu0
    %v170 = vadd.f32 %v112, %v169
    %v171 = vpop.f32.mrb[0].mxu0
    %v172 = vpop.f32.mrb[0].mxu0
    %v173 = vadd.f32 %v112, %v172
    %v174 = vpop.f32.mrb[0].mxu0
    %175 = vdwg.mxu0
    %v176 = vmax.f32 %v170, 0.0
    %v177 = vmax.f32 %v173, 0.0
    %v178 = vsel %vm131, %v176, 0.0
    %179 = vadd.xlane.f32.xlu0 %v178
    %v180 = vpop.xlane.xlu0 %179
    %v181 = vsel %vm131, %v177, 0.0
    %182 = vadd.xlane.f32.xlu0 %v181
    %v183 = vpop.xlane.xlu0 %182
    %v184 = vrcp.pop 32.0
    %v185 = vmul.f32 %v180, %v184
    %v186 = vmul.f32 %v183, %v184
    %v187 = vsub.f32 %v176, %v185
    %v188 = vsub.f32 %v177, %v186
    %v189 = vmul.f32 %v187, %v187
    %v190 = vmul.f32 %v188, %v188
    %v191 = vsel %vm131, %v189, 0.0
    %192 = vadd.xlane.f32.xlu0 %v191
    %v193 = vpop.xlane.xlu0 %192
    %v194 = vsel %vm131, %v190, 0.0
    %195 = vadd.xlane.f32.xlu0 %v194
    %v196 = vpop.xlane.xlu0 %195
    %v197 = vmul.f32 %v193, %v184
    %v198 = vmul.f32 %v196, %v184
    %v199 = vadd.f32 %v197, 1e-05
    %v200 = vadd.f32 %v198, 1e-05
    %v201 = vrsqrt.pop %v199
    %v202 = vrsqrt.pop %v200
    %v203 = vmul.f32 %v187, %v201
    %v204 = vmul.f32 %v188, %v202
    %v205 = vld [vmem:[#allocation8] sm:$0x1]
    %v207 = vlaneseq
    %v208 = vshrl.u32 %v207, 7
    %v209 = vsub.s32 0, %v208
    %v210 = vrot.slane %v205, %v209
    %v212 = vmul.f32 %v203, %v210
    %v213 = vmul.f32 %v204, %v210
    %v214 = vld [vmem:[#allocation10] sm:$0x1]
    %v216 = vlaneseq
    %v217 = vshrl.u32 %v216, 7
    %v218 = vsub.s32 0, %v217
    %v219 = vrot.slane %v214, %v218
    %v221 = vadd.f32 %v212, %v219
    %v222 = vadd.f32 %v213, %v219
    %v223 = vld [vmem:[#allocation11] sm:$0xf]
    %v224 = vld [vmem:[#allocation11 + $0x4] sm:$0xf]
    %v225 = vunpack.c.l.bf16 %v223
    %v226 = vunpack.c.l.bf16 %v224
    %v227 = vmul.f32 %v221, %v225
    %v228 = vmul.f32 %v222, %v226
    %229 = vst.msk [vmem:[#allocation13] sm:$0xff] %vm131, %v227
    %230 = vst.msk [vmem:[#allocation13 + $0x8] sm:$0xff] %vm131, %v228
    // Predicated region
    $region50: #{tpu_custom_call.1} parent=1 // pred_check
      _
    $region51: #{tpu_custom_call.1} parent=1 // pred_check_branch
      %232 = sbr.rel (0) target = $region53
    $region52: #{tpu_custom_call.1} parent=1 // pred_region
      %s234 = ssub.s32 256, 256
      %235 = vsyncadd [#allocation4], %s234
      %s236 = sshll.u32 [#allocation13], 4
      %s237 = int_to_ptr.vmem [resolvable:$true] %s236
      %242 = dma.vmem_to_hbm [thread:$0]  %s237, 256, %s6, [#allocation4], 128, 128, 8
    $region53: #{tpu_custom_call.1} parent=1 // pred_fallthru
      _
    // Predicated region
    $region54: #{tpu_custom_call.1} parent=1 // pred_check
      _
    $region55: #{tpu_custom_call.1} parent=1 // pred_check_branch
      %244 = sbr.rel (0) target = $region57
    $region56: #{tpu_custom_call.1} parent=1 // pred_region
      %245 = dma.done [#allocation4], 256
    $region57: #{tpu_custom_call.1} parent=1 // pred_fallthru
      _
    %246 = vsyncpa [#allocation3], 1
    %247 = vsyncpa [#allocation6], 1
    %248 = vsyncpa [#allocation9], 1
    %249 = vsyncpa [#allocation12], 1
    %250 = vsyncpa [#allocation4], 1

</llo_original>
